<compile_context>
chip_gen: v7x
topology: tpu7x:2x2x1
jax: 0.10.0
libtpu: 0.0.40
codegen_flags: <defaults>
</compile_context>

<pallas_src>
import math
from functools import partial  # noqa: F401  (kept for API parity with v1)

import jax
import jax.numpy as jnp
import numpy as np
from jax.experimental import pallas as pl
from jax.experimental.pallas import tpu as pltpu

MID_SCALE = 0.1
LONG_SCALE = 0.1
CROSS_ENT_SCALE = 0.5
EPS = 1e-8
_NCOLS = 16  # 11 used: [sum_t, sum_t^2, (sx, sxx, sxt) x {short, mid, long}]


def _round_up(x, m):
    return ((x + m - 1) // m) * m


def _cdiv(a, b):
    return (a + b - 1) // b


def _vmem_capacity_bytes():
    """Generation-aware VMEM capacity; conservative 64 MiB fallback (v7x per-TC)."""
    try:
        info = pltpu.get_tpu_info()
        cap = getattr(info, "vmem_capacity_bytes", None)
        if cap:
            return int(cap)
    except Exception:
        pass
    return 64 * 1024 * 1024


def _detect_num_cores():
    """Number of TensorCores to split the reduction across (megacore / v7x)."""
    # TODO(synk): switch to an explicit TpuInfo core-count field once exposed.
    try:
        info = pltpu.get_tpu_info()
    except Exception:
        return 1
    for attr in ("num_cores", "core_count", "num_tensorcores", "tensorcore_count"):
        v = getattr(info, attr, None)
        if isinstance(v, int) and v > 0:
            return v
    return 1


def _moments_kernel(target_ref, xs_ref, xm_ref, xl_ref, acc_ref):
    """Streaming per-(folded-)row moments for one time tile.

    acc_ref: (1, rows, _NCOLS) f32, resident across the time (arbitrary) axis.
    Column layout: 0 sum_t, 1 sum_t^2, [2,5,8]+(0,1,2) = sum_x, sum_x^2, sum_x*t
    for short / mid / long.
    """
    t_idx = pl.program_id(1)

    tgt = target_ref[...].astype(jnp.float32)
    cols = [jnp.sum(tgt, axis=-1, keepdims=True),
            jnp.sum(tgt * tgt, axis=-1, keepdims=True)]
    for x_ref in (xs_ref, xm_ref, xl_ref):
        x = x_ref[...].astype(jnp.float32)
        cols.append(jnp.sum(x, axis=-1, keepdims=True))
        cols.append(jnp.sum(x * x, axis=-1, keepdims=True))
        cols.append(jnp.sum(x * tgt, axis=-1, keepdims=True))

    rows, ncols = acc_ref.shape[1], acc_ref.shape[2]
    lane = jax.lax.broadcasted_iota(jnp.int32, (rows, ncols), 1)
    update = jnp.zeros((rows, ncols), jnp.float32)
    for i, col in enumerate(cols):
        update = update + jnp.where(lane == i, col, 0.0)

    @pl.when(t_idx == 0)
    def _init():
        acc_ref[...] = jnp.zeros_like(acc_ref)

    # Single full-row read-modify-write per grid step.
    acc_ref[...] += update[None]


def spex_plus_loss(pred, target, speaker_id, is_train=True, tile_t=None,
                   num_cores=None):
    """SpexPlus loss.

    pred: dict with 'short'/'mid'/'long' of shape (B, 1, T) (f32 or bf16) and
    'logits' of shape (B, C). target: (B, 1, T). speaker_id: (B,) int.
    """
    target2d = jnp.squeeze(target, axis=1)
    xs = jnp.squeeze(pred['short'], axis=1)
    xm = jnp.squeeze(pred['mid'], axis=1)
    xl = jnp.squeeze(pred['long'], axis=1)
    streams = (target2d, xs, xm, xl)

    B, T = target2d.shape
    if num_cores is None:
        num_cores = _detect_num_cores()
    num_cores = max(1, int(num_cores))

    # ---- batch -> sublane fold (fill the 8/16-row physical packing) ----------
    pack = 8
    for s in streams:
        isz = jnp.dtype(s.dtype).itemsize
        pack = max(pack, 8 * max(1, 4 // isz))      # 8 rows f32, 16 bf16, 32 i8
    S = pack // math.gcd(B, pack)
    rows = B * S

    # ---- generation-aware tile sizing (sublane-padding & dtype aware) --------
    vmem_cap = _vmem_capacity_bytes()
    budget = max(8 << 20, (vmem_cap * 3) // 8)       # waveform double-buffer budget
    vmem_limit = int(min((vmem_cap * 3) // 4, budget + (16 << 20)))

    bytes_per_t = 0                                  # bytes per time element, all 4 streams
    for s in streams:
        isz = jnp.dtype(s.dtype).itemsize
        sub = 8 * max(1, 4 // isz)                   # physical sublane packing of this dtype
        bytes_per_t += _round_up(rows, sub) * isz

    fold_T0 = _round_up(T, S * 128) // S             # per-folded-row length (mult. of 128)
    if tile_t is None:
        tile_cap = max(128, ((budget // (2 * bytes_per_t)) // 128) * 128)
    else:
        tile_cap = max(128, (int(tile_t) // 128) * 128)
    tile_cap = min(tile_cap, fold_T0)

    # Balance the tile against T so padding stays < 128 per folded row.
    nb_total = _round_up(_cdiv(fold_T0, tile_cap), num_cores)
    tile_t = _round_up(_cdiv(fold_T0, nb_total), 128)
    fold_T = tile_t * nb_total
    nb_per_core = nb_total // num_cores
    t_pad = fold_T * S

    def fold(x):
        if t_pad != T:
            # Zero padding does not change sum / sum^2 / cross moments; the
            # true T is used in the wrapper finalize.
            x = jnp.pad(x, [(0, 0), (0, t_pad - T)])
        return x.reshape(rows, fold_T)               # no-copy row-major split

    folded = [fold(x) for x in streams]

    def time_map(c, k):
        return (0, c * nb_per_core + k)

    wav_spec = pl.BlockSpec((rows, tile_t), time_map)

    moments = pl.pallas_call(
        _moments_kernel,
        out_shape=jax.ShapeDtypeStruct((num_cores, rows, _NCOLS), jnp.float32),
        grid=(num_cores, nb_per_core),
        in_specs=[wav_spec, wav_spec, wav_spec, wav_spec],
        out_specs=pl.BlockSpec((1, rows, _NCOLS), lambda c, k: (c, 0, 0)),
        compiler_params=pltpu.CompilerParams(
            dimension_semantics=("parallel", "arbitrary"),
            vmem_limit_bytes=vmem_limit),
    )(*folded)

    # ---- finalize in plain JAX (O(B) + O(B*C), trivially cheap) --------------
    acc = jnp.sum(moments, axis=0)                       # sum per-core partials
    acc = jnp.sum(acc.reshape(B, S, _NCOLS), axis=1)     # sum sublane-fold partials

    inv_t = 1.0 / float(T)
    sum_t = acc[:, 0]
    t_energy = jnp.maximum(acc[:, 1] - sum_t * sum_t * inv_t, 0.0)  # ||t - mean||^2

    def sisdr_mean(col):
        sx, sxx, sxt = acc[:, col], acc[:, col + 1], acc[:, col + 2]
        dot = sxt - sx * sum_t * inv_t                   # <x_c, t_c>
        x_energy = jnp.maximum(sxx - sx * sx * inv_t, 0.0)
        alpha = dot / (t_energy + EPS)                   # same EPS placement as ref
        num = alpha * alpha * t_energy                   # ||alpha * t_c||^2
        den = jnp.maximum(x_energy - 2.0 * alpha * dot + num, 0.0)
        return jnp.mean(10.0 * jnp.log10(num / (den + EPS) + EPS))

    s_short, s_mid, s_long = sisdr_mean(2), sisdr_mean(5), sisdr_mean(8)
    phi = 1.0 - MID_SCALE - LONG_SCALE
    base = (-phi * s_short - MID_SCALE * s_mid - LONG_SCALE * s_long) / B

    logits = pred['logits'].astype(jnp.float32)
    spk = speaker_id.astype(jnp.int32)
    logp = jax.nn.log_softmax(logits, axis=-1)
    ce = -jnp.mean(jnp.take_along_axis(logp, spk[:, None], axis=1)[:, 0])

    loss = base + (CROSS_ENT_SCALE * ce if is_train else 0.0)
    return {'loss': loss, 'ce': ce}


def _reference(pred, target, speaker_id, is_train=True):
    """Pure-JAX reference (two-pass, mirrors the PyTorch module)."""
    def norm(x):
        x = jnp.squeeze(x, axis=1).astype(jnp.float32)
        return x - jnp.mean(x, axis=-1, keepdims=True)

    tgt = norm(target)

    def sisdr(x):
        x = norm(x)
        alpha = jnp.sum(x * tgt, -1, keepdims=True) / (
            jnp.sum(tgt * tgt, -1, keepdims=True) + EPS)
        s_t = alpha * tgt
        e = x - s_t
        return jnp.mean(10.0 * jnp.log10(
            jnp.sum(s_t * s_t, -1) / (jnp.sum(e * e, -1) + EPS) + EPS))

    phi = 1.0 - MID_SCALE - LONG_SCALE
    B = target.shape[0]
    base = (-phi * sisdr(pred['short']) - MID_SCALE * sisdr(pred['mid'])
            - LONG_SCALE * sisdr(pred['long'])) / B
    logits = pred['logits'].astype(jnp.float32)
    logp = jax.nn.log_softmax(logits, axis=-1)
    ce = -jnp.mean(jnp.take_along_axis(logp, speaker_id[:, None], axis=1)[:, 0])
    loss = base + (CROSS_ENT_SCALE * ce if is_train else 0.0)
    return {'loss': loss, 'ce': ce}


if __name__ == "__main__":
    key = jax.random.PRNGKey(0)
    B, T, C = 4, 1024, 16  # batch, waveform length, num speakers

    k0, k1, k2, k3, k4, k5 = jax.random.split(key, 6)
    target = jax.random.normal(k0, (B, 1, T), dtype=jnp.float32)
    pred = {
        'short': target + 0.1 * jax.random.normal(k1, (B, 1, T), dtype=jnp.float32),
        'mid': target + 0.2 * jax.random.normal(k2, (B, 1, T), dtype=jnp.float32),
        'long': target + 0.3 * jax.random.normal(k3, (B, 1, T), dtype=jnp.float32),
        'logits': jax.random.normal(k4, (B, C), dtype=jnp.float32),
    }
    speaker_id = jax.random.randint(k5, (B,), 0, C, dtype=jnp.int32)

    ref = _reference(pred, target, speaker_id, is_train=True)

    # 1) Multi-tile accumulation + batch->sublane fold (B=4 -> S=2, rows=8).
    out = spex_plus_loss(pred, target, speaker_id, is_train=True, tile_t=256)
    jax.block_until_ready(out)
    np.testing.assert_allclose(np.asarray(out['loss']), np.asarray(ref['loss']),
                               rtol=1e-3, atol=1e-3)
    np.testing.assert_allclose(np.asarray(out['ce']), np.asarray(ref['ce']),
                               rtol=1e-3, atol=1e-3)

    # 2) Forced 2-core split (per-core partial moments summed in the wrapper);
    #    runs serialized but correct on single-TensorCore chips.
    out_mc = spex_plus_loss(pred, target, speaker_id, is_train=True, tile_t=256,
                            num_cores=2)
    jax.block_until_ready(out_mc)
    np.testing.assert_allclose(np.asarray(out_mc['loss']), np.asarray(ref['loss']),
                               rtol=1e-3, atol=1e-3)

    # 3) Ragged T + bf16 prediction streams (mixed dtype), eval mode, auto tile.
    T2 = 1000
    t2 = jax.random.normal(k0, (B, 1, T2), dtype=jnp.float32)

    def _mk(kk, s):
        return (t2 + s * jax.random.normal(kk, (B, 1, T2),
                                           dtype=jnp.float32)).astype(jnp.bfloat16)

    pred2 = {'short': _mk(k1, 0.1), 'mid': _mk(k2, 0.2), 'long': _mk(k3, 0.3),
             'logits': pred['logits']}
    out2 = spex_plus_loss(pred2, t2, speaker_id, is_train=False)
    jax.block_until_ready(out2)
    ref2 = _reference(pred2, t2, speaker_id, is_train=False)
    np.testing.assert_allclose(np.asarray(out2['loss']), np.asarray(ref2['loss']),
                               rtol=1e-3, atol=1e-3)
    np.testing.assert_allclose(np.asarray(out2['ce']), np.asarray(ref2['ce']),
                               rtol=1e-3, atol=1e-3)

    print("KERNEL_OK")
</pallas_src>

<mosaic_0001>
module attributes {stable_mosaic.version = 11 : i64} {
  func.func @_moments_kernel(%arg0: i32, %arg1: i32, %arg2: memref<8x256xf32, #tpu.memory_space<vmem>>, %arg3: memref<8x256xf32, #tpu.memory_space<vmem>>, %arg4: memref<8x256xf32, #tpu.memory_space<vmem>>, %arg5: memref<8x256xf32, #tpu.memory_space<vmem>>, %arg6: memref<1x8x16xf32, #tpu.memory_space<vmem>>) attributes {dimension_semantics = [#tpu.dimension_semantics<parallel>, #tpu.dimension_semantics<arbitrary>], iteration_bounds = array<i64: 1, 2>, scalar_prefetch = 0 : i64, scratch_operands = 0 : i64, tpu.core_type = #tpu.core_type<tc>, window_params = [{transform_indices = @transform_0, window_bounds = array<i64: 8, 256>}, {transform_indices = @transform_1, window_bounds = array<i64: 8, 256>}, {transform_indices = @transform_2, window_bounds = array<i64: 8, 256>}, {transform_indices = @transform_3, window_bounds = array<i64: 8, 256>}, {transform_indices = @transform_4, window_bounds = array<i64: 1, 8, 16>}]} {
    %c0 = arith.constant 0 : index
    %c0_0 = arith.constant 0 : index
    %0 = vector.load %arg2[%c0, %c0_0] : memref<8x256xf32, #tpu.memory_space<vmem>>, vector<8x256xf32>
    %cst = arith.constant dense<0.000000e+00> : vector<8xf32>
    %1 = vector.multi_reduction <add>, %0, %cst [1] : vector<8x256xf32> to vector<8xf32>
    %2 = vector.shape_cast %1 : vector<8xf32> to vector<8x1xf32>
    %3 = arith.mulf %0, %0 : vector<8x256xf32>
    %cst_1 = arith.constant dense<0.000000e+00> : vector<8xf32>
    %4 = vector.multi_reduction <add>, %3, %cst_1 [1] : vector<8x256xf32> to vector<8xf32>
    %5 = vector.shape_cast %4 : vector<8xf32> to vector<8x1xf32>
    %c0_2 = arith.constant 0 : index
    %c0_3 = arith.constant 0 : index
    %6 = vector.load %arg3[%c0_2, %c0_3] : memref<8x256xf32, #tpu.memory_space<vmem>>, vector<8x256xf32>
    %cst_4 = arith.constant dense<0.000000e+00> : vector<8xf32>
    %7 = vector.multi_reduction <add>, %6, %cst_4 [1] : vector<8x256xf32> to vector<8xf32>
    %8 = vector.shape_cast %7 : vector<8xf32> to vector<8x1xf32>
    %9 = arith.mulf %6, %6 : vector<8x256xf32>
    %cst_5 = arith.constant dense<0.000000e+00> : vector<8xf32>
    %10 = vector.multi_reduction <add>, %9, %cst_5 [1] : vector<8x256xf32> to vector<8xf32>
    %11 = vector.shape_cast %10 : vector<8xf32> to vector<8x1xf32>
    %12 = arith.mulf %6, %0 : vector<8x256xf32>
    %cst_6 = arith.constant dense<0.000000e+00> : vector<8xf32>
    %13 = vector.multi_reduction <add>, %12, %cst_6 [1] : vector<8x256xf32> to vector<8xf32>
    %14 = vector.shape_cast %13 : vector<8xf32> to vector<8x1xf32>
    %c0_7 = arith.constant 0 : index
    %c0_8 = arith.constant 0 : index
    %15 = vector.load %arg4[%c0_7, %c0_8] : memref<8x256xf32, #tpu.memory_space<vmem>>, vector<8x256xf32>
    %cst_9 = arith.constant dense<0.000000e+00> : vector<8xf32>
    %16 = vector.multi_reduction <add>, %15, %cst_9 [1] : vector<8x256xf32> to vector<8xf32>
    %17 = vector.shape_cast %16 : vector<8xf32> to vector<8x1xf32>
    %18 = arith.mulf %15, %15 : vector<8x256xf32>
    %cst_10 = arith.constant dense<0.000000e+00> : vector<8xf32>
    %19 = vector.multi_reduction <add>, %18, %cst_10 [1] : vector<8x256xf32> to vector<8xf32>
    %20 = vector.shape_cast %19 : vector<8xf32> to vector<8x1xf32>
    %21 = arith.mulf %15, %0 : vector<8x256xf32>
    %cst_11 = arith.constant dense<0.000000e+00> : vector<8xf32>
    %22 = vector.multi_reduction <add>, %21, %cst_11 [1] : vector<8x256xf32> to vector<8xf32>
    %23 = vector.shape_cast %22 : vector<8xf32> to vector<8x1xf32>
    %c0_12 = arith.constant 0 : index
    %c0_13 = arith.constant 0 : index
    %24 = vector.load %arg5[%c0_12, %c0_13] : memref<8x256xf32, #tpu.memory_space<vmem>>, vector<8x256xf32>
    %cst_14 = arith.constant dense<0.000000e+00> : vector<8xf32>
    %25 = vector.multi_reduction <add>, %24, %cst_14 [1] : vector<8x256xf32> to vector<8xf32>
    %26 = vector.shape_cast %25 : vector<8xf32> to vector<8x1xf32>
    %27 = arith.mulf %24, %24 : vector<8x256xf32>
    %cst_15 = arith.constant dense<0.000000e+00> : vector<8xf32>
    %28 = vector.multi_reduction <add>, %27, %cst_15 [1] : vector<8x256xf32> to vector<8xf32>
    %29 = vector.shape_cast %28 : vector<8xf32> to vector<8x1xf32>
    %30 = arith.mulf %24, %0 : vector<8x256xf32>
    %cst_16 = arith.constant dense<0.000000e+00> : vector<8xf32>
    %31 = vector.multi_reduction <add>, %30, %cst_16 [1] : vector<8x256xf32> to vector<8xf32>
    %32 = vector.shape_cast %31 : vector<8xf32> to vector<8x1xf32>
    %33 = tpu.iota {dimensions = array<i32: 1>} : vector<8x16xi32>
    %cst_17 = arith.constant 0.000000e+00 : f32
    %34 = vector.broadcast %cst_17 : f32 to vector<8x16xf32>
    %c0_i32 = arith.constant 0 : i32
    %35 = vector.broadcast %c0_i32 : i32 to vector<8x16xi32>
    %36 = arith.cmpi eq, %33, %35 : vector<8x16xi32>
    %cst_18 = arith.constant 0.000000e+00 : f32
    %37 = vector.shape_cast %2 : vector<8x1xf32> to vector<8x1xf32>
    %38 = vector.broadcast %37 : vector<8x1xf32> to vector<8x16xf32>
    %39 = vector.broadcast %cst_18 : f32 to vector<8x16xf32>
    %40 = arith.select %36, %38, %39 : vector<8x16xi1>, vector<8x16xf32>
    %41 = arith.addf %34, %40 : vector<8x16xf32>
    %c1_i32 = arith.constant 1 : i32
    %42 = vector.broadcast %c1_i32 : i32 to vector<8x16xi32>
    %43 = arith.cmpi eq, %33, %42 : vector<8x16xi32>
    %cst_19 = arith.constant 0.000000e+00 : f32
    %44 = vector.shape_cast %5 : vector<8x1xf32> to vector<8x1xf32>
    %45 = vector.broadcast %44 : vector<8x1xf32> to vector<8x16xf32>
    %46 = vector.broadcast %cst_19 : f32 to vector<8x16xf32>
    %47 = arith.select %43, %45, %46 : vector<8x16xi1>, vector<8x16xf32>
    %48 = arith.addf %41, %47 : vector<8x16xf32>
    %c2_i32 = arith.constant 2 : i32
    %49 = vector.broadcast %c2_i32 : i32 to vector<8x16xi32>
    %50 = arith.cmpi eq, %33, %49 : vector<8x16xi32>
    %cst_20 = arith.constant 0.000000e+00 : f32
    %51 = vector.shape_cast %8 : vector<8x1xf32> to vector<8x1xf32>
    %52 = vector.broadcast %51 : vector<8x1xf32> to vector<8x16xf32>
    %53 = vector.broadcast %cst_20 : f32 to vector<8x16xf32>
    %54 = arith.select %50, %52, %53 : vector<8x16xi1>, vector<8x16xf32>
    %55 = arith.addf %48, %54 : vector<8x16xf32>
    %c3_i32 = arith.constant 3 : i32
    %56 = vector.broadcast %c3_i32 : i32 to vector<8x16xi32>
    %57 = arith.cmpi eq, %33, %56 : vector<8x16xi32>
    %cst_21 = arith.constant 0.000000e+00 : f32
    %58 = vector.shape_cast %11 : vector<8x1xf32> to vector<8x1xf32>
    %59 = vector.broadcast %58 : vector<8x1xf32> to vector<8x16xf32>
    %60 = vector.broadcast %cst_21 : f32 to vector<8x16xf32>
    %61 = arith.select %57, %59, %60 : vector<8x16xi1>, vector<8x16xf32>
    %62 = arith.addf %55, %61 : vector<8x16xf32>
    %c4_i32 = arith.constant 4 : i32
    %63 = vector.broadcast %c4_i32 : i32 to vector<8x16xi32>
    %64 = arith.cmpi eq, %33, %63 : vector<8x16xi32>
    %cst_22 = arith.constant 0.000000e+00 : f32
    %65 = vector.shape_cast %14 : vector<8x1xf32> to vector<8x1xf32>
    %66 = vector.broadcast %65 : vector<8x1xf32> to vector<8x16xf32>
    %67 = vector.broadcast %cst_22 : f32 to vector<8x16xf32>
    %68 = arith.select %64, %66, %67 : vector<8x16xi1>, vector<8x16xf32>
    %69 = arith.addf %62, %68 : vector<8x16xf32>
    %c5_i32 = arith.constant 5 : i32
    %70 = vector.broadcast %c5_i32 : i32 to vector<8x16xi32>
    %71 = arith.cmpi eq, %33, %70 : vector<8x16xi32>
    %cst_23 = arith.constant 0.000000e+00 : f32
    %72 = vector.shape_cast %17 : vector<8x1xf32> to vector<8x1xf32>
    %73 = vector.broadcast %72 : vector<8x1xf32> to vector<8x16xf32>
    %74 = vector.broadcast %cst_23 : f32 to vector<8x16xf32>
    %75 = arith.select %71, %73, %74 : vector<8x16xi1>, vector<8x16xf32>
    %76 = arith.addf %69, %75 : vector<8x16xf32>
    %c6_i32 = arith.constant 6 : i32
    %77 = vector.broadcast %c6_i32 : i32 to vector<8x16xi32>
    %78 = arith.cmpi eq, %33, %77 : vector<8x16xi32>
    %cst_24 = arith.constant 0.000000e+00 : f32
    %79 = vector.shape_cast %20 : vector<8x1xf32> to vector<8x1xf32>
    %80 = vector.broadcast %79 : vector<8x1xf32> to vector<8x16xf32>
    %81 = vector.broadcast %cst_24 : f32 to vector<8x16xf32>
    %82 = arith.select %78, %80, %81 : vector<8x16xi1>, vector<8x16xf32>
    %83 = arith.addf %76, %82 : vector<8x16xf32>
    %c7_i32 = arith.constant 7 : i32
    %84 = vector.broadcast %c7_i32 : i32 to vector<8x16xi32>
    %85 = arith.cmpi eq, %33, %84 : vector<8x16xi32>
    %cst_25 = arith.constant 0.000000e+00 : f32
    %86 = vector.shape_cast %23 : vector<8x1xf32> to vector<8x1xf32>
    %87 = vector.broadcast %86 : vector<8x1xf32> to vector<8x16xf32>
    %88 = vector.broadcast %cst_25 : f32 to vector<8x16xf32>
    %89 = arith.select %85, %87, %88 : vector<8x16xi1>, vector<8x16xf32>
    %90 = arith.addf %83, %89 : vector<8x16xf32>
    %c8_i32 = arith.constant 8 : i32
    %91 = vector.broadcast %c8_i32 : i32 to vector<8x16xi32>
    %92 = arith.cmpi eq, %33, %91 : vector<8x16xi32>
    %cst_26 = arith.constant 0.000000e+00 : f32
    %93 = vector.shape_cast %26 : vector<8x1xf32> to vector<8x1xf32>
    %94 = vector.broadcast %93 : vector<8x1xf32> to vector<8x16xf32>
    %95 = vector.broadcast %cst_26 : f32 to vector<8x16xf32>
    %96 = arith.select %92, %94, %95 : vector<8x16xi1>, vector<8x16xf32>
    %97 = arith.addf %90, %96 : vector<8x16xf32>
    %c9_i32 = arith.constant 9 : i32
    %98 = vector.broadcast %c9_i32 : i32 to vector<8x16xi32>
    %99 = arith.cmpi eq, %33, %98 : vector<8x16xi32>
    %cst_27 = arith.constant 0.000000e+00 : f32
    %100 = vector.shape_cast %29 : vector<8x1xf32> to vector<8x1xf32>
    %101 = vector.broadcast %100 : vector<8x1xf32> to vector<8x16xf32>
    %102 = vector.broadcast %cst_27 : f32 to vector<8x16xf32>
    %103 = arith.select %99, %101, %102 : vector<8x16xi1>, vector<8x16xf32>
    %104 = arith.addf %97, %103 : vector<8x16xf32>
    %c10_i32 = arith.constant 10 : i32
    %105 = vector.broadcast %c10_i32 : i32 to vector<8x16xi32>
    %106 = arith.cmpi eq, %33, %105 : vector<8x16xi32>
    %cst_28 = arith.constant 0.000000e+00 : f32
    %107 = vector.shape_cast %32 : vector<8x1xf32> to vector<8x1xf32>
    %108 = vector.broadcast %107 : vector<8x1xf32> to vector<8x16xf32>
    %109 = vector.broadcast %cst_28 : f32 to vector<8x16xf32>
    %110 = arith.select %106, %108, %109 : vector<8x16xi1>, vector<8x16xf32>
    %111 = arith.addf %104, %110 : vector<8x16xf32>
    %c0_i32_29 = arith.constant 0 : i32
    %112 = arith.cmpi eq, %arg1, %c0_i32_29 : i32
    %113 = arith.extui %112 : i1 to i32
    %c0_i32_30 = arith.constant 0 : i32
    %114 = arith.cmpi ne, %113, %c0_i32_30 : i32
    scf.if %114 {
      %cst_37 = arith.constant 0.000000e+00 : f32
      %119 = vector.broadcast %cst_37 : f32 to vector<1x8x16xf32>
      %c0_38 = arith.constant 0 : index
      %c0_39 = arith.constant 0 : index
      %c0_40 = arith.constant 0 : index
      %120 = vector.load %arg6[%c0_38, %c0_39, %c0_40] : memref<1x8x16xf32, #tpu.memory_space<vmem>>, vector<1x8x16xf32>
      tpu.vector_store %arg6[%c0_38, %c0_39, %c0_40], %119 {strides = array<i32>} : memref<1x8x16xf32, #tpu.memory_space<vmem>>, vector<1x8x16xf32>,
    } else {
    }
    %c0_31 = arith.constant 0 : index
    %c0_32 = arith.constant 0 : index
    %c0_33 = arith.constant 0 : index
    %115 = vector.load %arg6[%c0_31, %c0_32, %c0_33] : memref<1x8x16xf32, #tpu.memory_space<vmem>>, vector<1x8x16xf32>
    %116 = vector.shape_cast %111 : vector<8x16xf32> to vector<1x8x16xf32>
    %117 = arith.addf %115, %116 : vector<1x8x16xf32>
    %c0_34 = arith.constant 0 : index
    %c0_35 = arith.constant 0 : index
    %c0_36 = arith.constant 0 : index
    %118 = vector.load %arg6[%c0_34, %c0_35, %c0_36] : memref<1x8x16xf32, #tpu.memory_space<vmem>>, vector<1x8x16xf32>
    tpu.vector_store %arg6[%c0_34, %c0_35, %c0_36], %117 {strides = array<i32>} : memref<1x8x16xf32, #tpu.memory_space<vmem>>, vector<1x8x16xf32>,
    return
  }
  func.func @transform_0(%arg0: i32, %arg1: i32) -> (i32, i32) {
    %c2_i32 = arith.constant 2 : i32
    %0 = arith.muli %arg0, %c2_i32 : i32
    %1 = arith.addi %0, %arg1 : i32
    %c0_i32 = arith.constant 0 : i32
    %c0_i32_0 = arith.constant 0 : i32
    return %c0_i32, %1 : i32, i32
  }
  func.func @transform_1(%arg0: i32, %arg1: i32) -> (i32, i32) {
    %c2_i32 = arith.constant 2 : i32
    %0 = arith.muli %arg0, %c2_i32 : i32
    %1 = arith.addi %0, %arg1 : i32
    %c0_i32 = arith.constant 0 : i32
    %c0_i32_0 = arith.constant 0 : i32
    return %c0_i32, %1 : i32, i32
  }
  func.func @transform_2(%arg0: i32, %arg1: i32) -> (i32, i32) {
    %c2_i32 = arith.constant 2 : i32
    %0 = arith.muli %arg0, %c2_i32 : i32
    %1 = arith.addi %0, %arg1 : i32
    %c0_i32 = arith.constant 0 : i32
    %c0_i32_0 = arith.constant 0 : i32
    return %c0_i32, %1 : i32, i32
  }
  func.func @transform_3(%arg0: i32, %arg1: i32) -> (i32, i32) {
    %c2_i32 = arith.constant 2 : i32
    %0 = arith.muli %arg0, %c2_i32 : i32
    %1 = arith.addi %0, %arg1 : i32
    %c0_i32 = arith.constant 0 : i32
    %c0_i32_0 = arith.constant 0 : i32
    return %c0_i32, %1 : i32, i32
  }
  func.func @transform_4(%arg0: i32, %arg1: i32) -> (i32, i32, i32) {
    %c0_i32 = arith.constant 0 : i32
    %c0_i32_0 = arith.constant 0 : i32
    %c0_i32_1 = arith.constant 0 : i32
    return %arg0, %c0_i32, %c0_i32_0 : i32, i32, i32
  }
}

</mosaic_0001>

<llo_original>
// kernel: tpu_custom_call.1
$region0: #{tpu_custom_call.1}
  #allocation0 [shape = 'u32[]', space=smem, size = 0x4, offset = 0x4, fixed_abs, tag = 'smem constant byte address 0x4 - core index']
  #allocation1 [shape = 'u32[144,128]{1,0:T(1,128)}', space=vmem, size = 0x12000, scoped, tag = 'internal scratch']
  %s0 = inlined_call_operand.hbm [shape: f32[8,512], index: 0, kind: input, shape index: {}]
  %s1 = inlined_call_operand.hbm [shape: f32[8,512], index: 1, kind: input, shape index: {}]
  %s2 = inlined_call_operand.hbm [shape: f32[8,512], index: 2, kind: input, shape index: {}]
  %s3 = inlined_call_operand.hbm [shape: f32[8,512], index: 3, kind: input, shape index: {}]
  %s4 = inlined_call_operand.hbm [shape: f32[1,8,16], index: 4, kind: output, shape index: {}]
  %s5 = sld [smem:[#allocation0]]
  $region69: #{tpu_custom_call.1} parent=0
    _
  %s7 = ssub.s32 1, %s5
  %s8 = scalar_select 0, %s7, %s5
  $region1: #{tpu_custom_call.1} parent=0
    #allocation2 [shape = 'u8[16384]{0}', space=vmem, size = 0x4000, scoped, tag = 'input window, operand 0']
    #allocation3 [shape = 's32[2]{0}', space=sflag, size = 0x8, scoped, tag = 'scoped memory for tpu_custom_call.1']
    #allocation4 [shape = 's32[2]{0}', space=sflag, size = 0x8, scoped, tag = 'scoped memory for tpu_custom_call.1']
    #allocation5 [shape = 'u8[16384]{0}', space=vmem, size = 0x4000, scoped, tag = 'input window, operand 1']
    #allocation6 [shape = 's32[2]{0}', space=sflag, size = 0x8, scoped, tag = 'scoped memory for tpu_custom_call.1']
    #allocation7 [shape = 'u8[16384]{0}', space=vmem, size = 0x4000, scoped, tag = 'input window, operand 2']
    #allocation8 [shape = 'u8[16384]{0}', space=vmem, size = 0x4000, scoped, tag = 'input window, operand 3']
    #allocation9 [shape = 's32[2]{0}', space=sflag, size = 0x8, scoped, tag = 'scoped memory for tpu_custom_call.1']
    #allocation10 [shape = 'u8[4096]{0}', space=vmem, size = 0x1000, scoped, tag = 'output window, operand 0, single buffered']
    %9 = vsyncpa [#allocation3], 0
    %s10 = scalar_lea.sflag [#allocation3], 1
    %11 = vsyncpa %s10, 0
    %12 = vsyncpa [#allocation6], 0
    %s13 = scalar_lea.sflag [#allocation6], 1
    %14 = vsyncpa %s13, 0
    %15 = vsyncpa [#allocation9], 0
    %s16 = scalar_lea.sflag [#allocation9], 1
    %17 = vsyncpa %s16, 0
    %18 = vsyncpa [#allocation4], 0
    loop: start=0, step=1, limit=4
    $region2: #{tpu_custom_call.1} parent=1 // loop_pre_header
      _
    $region3: #{tpu_custom_call.1} parent=1 // loop_header
      %s20 = sphi 0, %s24
      %p21 = scmp.ge.s32.totalorder %s20, 4
      %s27 = sphi 0, %s39
      %s28 = sphi 0, %s35
      %s29 = sphi 0, %s27
      %s30 = sphi 0, %s28
      %s31 = sphi 0, %s29
      %s32 = sphi 0, %s30
      %s46 = sphi 0, %s48
      %s49 = sphi 0, %s46
      %s50 = sphi 0, %s49
      %s66 = sphi 0, %s50
      %s76 = sphi 0, %s78
      %s79 = sphi 0, %s76
      %s80 = sphi 0, %s79
      %s96 = sphi 0, %s80
      %s106 = sphi 0, %s108
      %s109 = sphi 0, %s106
      %s110 = sphi 0, %s109
      %s126 = sphi 0, %s110
      %s136 = sphi 0, %s138
      %s139 = sphi 0, %s136
      %s140 = sphi 0, %s139
      %s156 = sphi 0, %s140
      %s162 = sphi 0, %s164
      %s165 = sphi 0, %s162
      %s166 = sphi 0, %s165
      %s182 = sphi 0, %s166
    $region4: #{tpu_custom_call.1} parent=1 // loop_header_branch
      %23 = sbr.rel (%p21) target = $region8
    $region5: #{tpu_custom_call.1} parent=1 // loop_body
      %s25 = ssub.s32 %s20, 1
      %s26 = ssub.s32 %s20, 2
      %s33 = sadd.s32 1, %s28
      %p34 = scmp.ge.s32.totalorder %s33, 2
      %s35 = scalar_select %p34, 0, %s33
      %s36 = sadd.s32 1, %s27
      %s37 = scalar_select %p34, %s36, %s27
      %p38 = scmp.ge.s32.totalorder %s37, 1
      %s39 = scalar_select %p38, 0, %s37
      %s40 = smul.u32 %s27, 2
      %s41 = sadd.s32 %s40, %s28
      %s42 = smul.u32 %s39, 2
      %s43 = sadd.s32 %s42, %s35
      %s44 = ssub.s32 %s41, %s43
      %p45 = scmp.eq.s32.totalorder %s44, 0
      %s47 = sadd.s32 %s46, 1
      %s48 = scalar_select %p45, %s46, %s47
      %p51 = pneg %p45
      %p52 = scmp.eq.s32.totalorder %s20, 1
      %p53 = por %p51, %p52
      %p54 = scmp.ne.s32.totalorder %s46, %s49
      %p55 = scmp.eq.s32.totalorder %s20, 0
      %p56 = por %p54, %p55
      %p57 = scmp.ne.s32.totalorder %s46, %s49
      %p58 = scmp.eq.s32.totalorder %s25, 1
      %p59 = por %p57, %p58
      %p60 = scmp.ne.s32.totalorder %s49, %s50
      %p61 = scmp.eq.s32.totalorder %s25, 0
      %p62 = por %p60, %p61
      %p63 = scmp.ne.s32.totalorder %s49, %s50
      %p64 = scmp.eq.s32.totalorder %s26, 1
      %p65 = por %p63, %p64
      %p67 = scmp.ne.s32.totalorder %s50, %s66
      %p68 = scmp.eq.s32.totalorder %s26, 0
      %p69 = por %p67, %p68
      %s70 = smul.u32 %s27, 2
      %s71 = sadd.s32 %s70, %s28
      %s72 = smul.u32 %s39, 2
      %s73 = sadd.s32 %s72, %s35
      %s74 = ssub.s32 %s71, %s73
      %p75 = scmp.eq.s32.totalorder %s74, 0
      %s77 = sadd.s32 %s76, 1
      %s78 = scalar_select %p75, %s76, %s77
      %p81 = pneg %p75
      %p82 = scmp.eq.s32.totalorder %s20, 1
      %p83 = por %p81, %p82
      %p84 = scmp.ne.s32.totalorder %s76, %s79
      %p85 = scmp.eq.s32.totalorder %s20, 0
      %p86 = por %p84, %p85
      %p87 = scmp.ne.s32.totalorder %s76, %s79
      %p88 = scmp.eq.s32.totalorder %s25, 1
      %p89 = por %p87, %p88
      %p90 = scmp.ne.s32.totalorder %s79, %s80
      %p91 = scmp.eq.s32.totalorder %s25, 0
      %p92 = por %p90, %p91
      %p93 = scmp.ne.s32.totalorder %s79, %s80
      %p94 = scmp.eq.s32.totalorder %s26, 1
      %p95 = por %p93, %p94
      %p97 = scmp.ne.s32.totalorder %s80, %s96
      %p98 = scmp.eq.s32.totalorder %s26, 0
      %p99 = por %p97, %p98
      %s100 = smul.u32 %s27, 2
      %s101 = sadd.s32 %s100, %s28
      %s102 = smul.u32 %s39, 2
      %s103 = sadd.s32 %s102, %s35
      %s104 = ssub.s32 %s101, %s103
      %p105 = scmp.eq.s32.totalorder %s104, 0
      %s107 = sadd.s32 %s106, 1
      %s108 = scalar_select %p105, %s106, %s107
      %p111 = pneg %p105
      %p112 = scmp.eq.s32.totalorder %s20, 1
      %p113 = por %p111, %p112
      %p114 = scmp.ne.s32.totalorder %s106, %s109
      %p115 = scmp.eq.s32.totalorder %s20, 0
      %p116 = por %p114, %p115
      %p117 = scmp.ne.s32.totalorder %s106, %s109
      %p118 = scmp.eq.s32.totalorder %s25, 1
      %p119 = por %p117, %p118
      %p120 = scmp.ne.s32.totalorder %s109, %s110
      %p121 = scmp.eq.s32.totalorder %s25, 0
      %p122 = por %p120, %p121
      %p123 = scmp.ne.s32.totalorder %s109, %s110
      %p124 = scmp.eq.s32.totalorder %s26, 1
      %p125 = por %p123, %p124
      %p127 = scmp.ne.s32.totalorder %s110, %s126
      %p128 = scmp.eq.s32.totalorder %s26, 0
      %p129 = por %p127, %p128
      %s130 = smul.u32 %s27, 2
      %s131 = sadd.s32 %s130, %s28
      %s132 = smul.u32 %s39, 2
      %s133 = sadd.s32 %s132, %s35
      %s134 = ssub.s32 %s131, %s133
      %p135 = scmp.eq.s32.totalorder %s134, 0
      %s137 = sadd.s32 %s136, 1
      %s138 = scalar_select %p135, %s136, %s137
      %p141 = pneg %p135
      %p142 = scmp.eq.s32.totalorder %s20, 1
      %p143 = por %p141, %p142
      %p144 = scmp.ne.s32.totalorder %s136, %s139
      %p145 = scmp.eq.s32.totalorder %s20, 0
      %p146 = por %p144, %p145
      %p147 = scmp.ne.s32.totalorder %s136, %s139
      %p148 = scmp.eq.s32.totalorder %s25, 1
      %p149 = por %p147, %p148
      %p150 = scmp.ne.s32.totalorder %s139, %s140
      %p151 = scmp.eq.s32.totalorder %s25, 0
      %p152 = por %p150, %p151
      %p153 = scmp.ne.s32.totalorder %s139, %s140
      %p154 = scmp.eq.s32.totalorder %s26, 1
      %p155 = por %p153, %p154
      %p157 = scmp.ne.s32.totalorder %s140, %s156
      %p158 = scmp.eq.s32.totalorder %s26, 0
      %p159 = por %p157, %p158
      %s160 = ssub.s32 %s27, %s39
      %p161 = scmp.eq.s32.totalorder %s160, 0
      %s163 = sadd.s32 %s162, 1
      %s164 = scalar_select %p161, %s162, %s163
      %p167 = pneg %p161
      %p168 = scmp.eq.s32.totalorder %s20, 1
      %p169 = por %p167, %p168
      %p170 = scmp.ne.s32.totalorder %s162, %s165
      %p171 = scmp.eq.s32.totalorder %s20, 0
      %p172 = por %p170, %p171
      %p173 = scmp.ne.s32.totalorder %s162, %s165
      %p174 = scmp.eq.s32.totalorder %s25, 1
      %p175 = por %p173, %p174
      %p176 = scmp.ne.s32.totalorder %s165, %s166
      %p177 = scmp.eq.s32.totalorder %s25, 0
      %p178 = por %p176, %p177
      %p179 = scmp.ne.s32.totalorder %s165, %s166
      %p180 = scmp.eq.s32.totalorder %s26, 1
      %p181 = por %p179, %p180
      %p183 = scmp.ne.s32.totalorder %s166, %s182
      %p184 = scmp.eq.s32.totalorder %s26, 0
      %p185 = por %p183, %p184
      %p186 = scmp.le.s32.totalorder 1, %s20
      %p187 = scmp.lt.s32.totalorder %s20, 3
      %p188 = pnand %p186, %p187
      %p189 = pneg %p188
      // Predicated region
      $region9: #{tpu_custom_call.1} parent=5 // pred_check
        _
      $region10: #{tpu_custom_call.1} parent=5 // pred_check_branch
        %191 = sbr.rel (%p188) target = $region12
      $region11: #{tpu_custom_call.1} parent=5 // pred_region
        %s192 = ssub.s32 %s20, 1
      $region12: #{tpu_custom_call.1} parent=5 // pred_fallthru
        _
      %p193 = scmp.lt.s32.totalorder %s20, 2
      // Predicated region
      $region13: #{tpu_custom_call.1} parent=5 // pred_check
        %p194 = pneg %p193
      $region14: #{tpu_custom_call.1} parent=5 // pred_check_branch
        %196 = sbr.rel (%p194) target = $region16
      $region15: #{tpu_custom_call.1} parent=5 // pred_region
        // Predicated region
        $region17: #{tpu_custom_call.1} parent=15 // pred_check
          %p197 = pneg %p56
        $region18: #{tpu_custom_call.1} parent=15 // pred_check_branch
          %199 = sbr.rel (%p197) target = $region20
        $region19: #{tpu_custom_call.1} parent=15 // pred_region
          %s200 = sand.u32 %s46, 1
          %s201 = scalar_lea.sflag [#allocation3], %s200
          %s202 = sand.u32 %s46, 1
          %s203 = smul.addr %s202, 16
          %s204 = scalar_lea.vmem [#allocation2], %s203
          %s205 = smul.u32 %s27, 2
          %s206 = sadd.s32 %s205, %s28
          %s207 = smul.u32 2, %s206
          %s209 = ssub.s32 256, 256
          %210 = vsyncadd %s201, %s209
          %s211 = smul.addr %s207, 128
          %s212 = scalar_lea.hbm %s0, %s211
          %s214 = sshll.u32 %s204, 4
          %s215 = int_to_ptr.vmem [resolvable:$true] %s214
          %217 = dma.hbm_to_vmem [thread:$0]  %s212, 256, %s215, %s201
        $region20: #{tpu_custom_call.1} parent=15 // pred_fallthru
          _
        // Predicated region
        $region21: #{tpu_custom_call.1} parent=15 // pred_check
          %p218 = pneg %p86
        $region22: #{tpu_custom_call.1} parent=15 // pred_check_branch
          %220 = sbr.rel (%p218) target = $region24
        $region23: #{tpu_custom_call.1} parent=15 // pred_region
          %s221 = sand.u32 %s20, 1
          %s222 = scalar_lea.sflag [#allocation6], %s221
          %s223 = sand.u32 %s76, 1
          %s224 = smul.addr %s223, 16
          %s225 = scalar_lea.vmem [#allocation5], %s224
          %s226 = smul.u32 %s27, 2
          %s227 = sadd.s32 %s226, %s28
          %s228 = smul.u32 2, %s227
          %s230 = ssub.s32 256, 256
          %231 = vsyncadd %s222, %s230
          %s232 = smul.addr %s228, 128
          %s233 = scalar_lea.hbm %s1, %s232
          %s235 = sshll.u32 %s225, 4
          %s236 = int_to_ptr.vmem [resolvable:$true] %s235
          %238 = dma.hbm_to_vmem [thread:$0]  %s233, 256, %s236, %s222
        $region24: #{tpu_custom_call.1} parent=15 // pred_fallthru
          _
        // Predicated region
        $region25: #{tpu_custom_call.1} parent=15 // pred_check
          %p239 = pneg %p116
        $region26: #{tpu_custom_call.1} parent=15 // pred_check_branch
          %241 = sbr.rel (%p239) target = $region28
        $region27: #{tpu_custom_call.1} parent=15 // pred_region
          %s242 = sand.u32 %s20, 1
          %s243 = scalar_lea.sflag [#allocation6], %s242
          %s244 = sand.u32 %s106, 1
          %s245 = smul.addr %s244, 16
          %s246 = scalar_lea.vmem [#allocation7], %s245
          %s247 = smul.u32 %s27, 2
          %s248 = sadd.s32 %s247, %s28
          %s249 = smul.u32 2, %s248
          %s251 = ssub.s32 256, 256
          %252 = vsyncadd %s243, %s251
          %s253 = smul.addr %s249, 128
          %s254 = scalar_lea.hbm %s2, %s253
          %s256 = sshll.u32 %s246, 4
          %s257 = int_to_ptr.vmem [resolvable:$true] %s256
          %259 = dma.hbm_to_vmem [thread:$0]  %s254, 256, %s257, %s243
        $region28: #{tpu_custom_call.1} parent=15 // pred_fallthru
          _
        // Predicated region
        $region29: #{tpu_custom_call.1} parent=15 // pred_check
          %p260 = pneg %p146
        $region30: #{tpu_custom_call.1} parent=15 // pred_check_branch
          %262 = sbr.rel (%p260) target = $region32
        $region31: #{tpu_custom_call.1} parent=15 // pred_region
          %s263 = sand.u32 %s136, 1
          %s264 = scalar_lea.sflag [#allocation9], %s263
          %s265 = sand.u32 %s136, 1
          %s266 = smul.addr %s265, 16
          %s267 = scalar_lea.vmem [#allocation8], %s266
          %s268 = smul.u32 %s27, 2
          %s269 = sadd.s32 %s268, %s28
          %s270 = smul.u32 2, %s269
          %s272 = ssub.s32 256, 256
          %273 = vsyncadd %s264, %s272
          %s274 = smul.addr %s270, 128
          %s275 = scalar_lea.hbm %s3, %s274
          %s277 = sshll.u32 %s267, 4
          %s278 = int_to_ptr.vmem [resolvable:$true] %s277
          %280 = dma.hbm_to_vmem [thread:$0]  %s275, 256, %s278, %s264
        $region32: #{tpu_custom_call.1} parent=15 // pred_fallthru
          _
      $region16: #{tpu_custom_call.1} parent=5 // pred_fallthru
        _
      %p281 = scmp.le.s32.totalorder 1, %s20
      %p282 = scmp.lt.s32.totalorder %s20, 3
      %p283 = pnand %p281, %p282
      %p284 = pneg %p283
      // Predicated region
      $region33: #{tpu_custom_call.1} parent=5 // pred_check
        _
      $region34: #{tpu_custom_call.1} parent=5 // pred_check_branch
        %286 = sbr.rel (%p283) target = $region36
      $region35: #{tpu_custom_call.1} parent=5 // pred_region
        %s287 = ssub.s32 %s20, 1
        %s288 = sand.u32 %s49, 1
        %s289 = scalar_lea.sflag [#allocation3], %s288
        %s290 = sand.u32 %s49, 1
        %s291 = smul.addr %s290, 16
        %s292 = scalar_lea.vmem [#allocation2], %s291
        // Predicated region
        $region37: #{tpu_custom_call.1} parent=35 // pred_check
          %p293 = pneg %p62
        $region38: #{tpu_custom_call.1} parent=35 // pred_check_branch
          %295 = sbr.rel (%p293) target = $region40
        $region39: #{tpu_custom_call.1} parent=35 // pred_region
          %296 = dma.done %s289, 256
        $region40: #{tpu_custom_call.1} parent=35 // pred_fallthru
          _
        %s297 = sand.u32 %s25, 1
        %s298 = scalar_lea.sflag [#allocation6], %s297
        %s299 = sand.u32 %s79, 1
        %s300 = smul.addr %s299, 16
        %s301 = scalar_lea.vmem [#allocation5], %s300
        // Predicated region
        $region41: #{tpu_custom_call.1} parent=35 // pred_check
          %p302 = pneg %p92
        $region42: #{tpu_custom_call.1} parent=35 // pred_check_branch
          %304 = sbr.rel (%p302) target = $region44
        $region43: #{tpu_custom_call.1} parent=35 // pred_region
          %305 = dma.done %s298, 256
        $region44: #{tpu_custom_call.1} parent=35 // pred_fallthru
          _
        %s306 = sand.u32 %s25, 1
        %s307 = scalar_lea.sflag [#allocation6], %s306
        %s308 = sand.u32 %s109, 1
        %s309 = smul.addr %s308, 16
        %s310 = scalar_lea.vmem [#allocation7], %s309
        // Predicated region
        $region45: #{tpu_custom_call.1} parent=35 // pred_check
          %p311 = pneg %p122
        $region46: #{tpu_custom_call.1} parent=35 // pred_check_branch
          %313 = sbr.rel (%p311) target = $region48
        $region47: #{tpu_custom_call.1} parent=35 // pred_region
          %314 = dma.done %s307, 256
        $region48: #{tpu_custom_call.1} parent=35 // pred_fallthru
          _
        %s315 = sand.u32 %s139, 1
        %s316 = scalar_lea.sflag [#allocation9], %s315
        %s317 = sand.u32 %s139, 1
        %s318 = smul.addr %s317, 16
        %s319 = scalar_lea.vmem [#allocation8], %s318
        // Predicated region
        $region49: #{tpu_custom_call.1} parent=35 // pred_check
          %p320 = pneg %p152
        $region50: #{tpu_custom_call.1} parent=35 // pred_check_branch
          %322 = sbr.rel (%p320) target = $region52
        $region51: #{tpu_custom_call.1} parent=35 // pred_region
          %323 = dma.done %s316, 256
        $region52: #{tpu_custom_call.1} parent=35 // pred_fallthru
          _
        %s324 = sand.u32 %s49, 1
        %s325 = scalar_lea.sflag [#allocation3], %s324
        %s326 = sand.u32 %s49, 1
        %s327 = smul.addr %s326, 16
        %s328 = scalar_lea.vmem [#allocation2], %s327
        %p329 = pneg %p62
        %p330 = pneg %p59
        %s331 = sand.u32 %s25, 1
        %s332 = scalar_lea.sflag [#allocation6], %s331
        %s333 = sand.u32 %s79, 1
        %s334 = smul.addr %s333, 16
        %s335 = scalar_lea.vmem [#allocation5], %s334
        %p336 = pneg %p92
        %p337 = pneg %p89
        %s338 = sand.u32 %s25, 1
        %s339 = scalar_lea.sflag [#allocation6], %s338
        %s340 = sand.u32 %s109, 1
        %s341 = smul.addr %s340, 16
        %s342 = scalar_lea.vmem [#allocation7], %s341
        %p343 = pneg %p122
        %p344 = pneg %p119
        %s345 = sand.u32 %s139, 1
        %s346 = scalar_lea.sflag [#allocation9], %s345
        %s347 = sand.u32 %s139, 1
        %s348 = smul.addr %s347, 16
        %s349 = scalar_lea.vmem [#allocation8], %s348
        %p350 = pneg %p152
        %p351 = pneg %p149
        %p352 = pneg %p178
        %p353 = pneg %p175
        %s354 = smul.u32 %s29, 2
        %s355 = sadd.s32 %s354, %s30
        %s356 = smul.u32 2, %s355
        %s357 = smul.u32 %s29, 2
        %s358 = sadd.s32 %s357, %s30
        %s359 = smul.u32 2, %s358
        %s360 = smul.u32 %s29, 2
        %s361 = sadd.s32 %s360, %s30
        %s362 = smul.u32 2, %s361
        %s363 = smul.u32 %s29, 2
        %s364 = sadd.s32 %s363, %s30
        %s365 = smul.u32 2, %s364
        %v366 = vld [vmem:[%s292] sm:$0xff]
        %v367 = vld [vmem:[%s292 + $0x8] sm:$0xff]
        %v368 = vadd.f32 %v366, %v367
        %369 = vadd.xlane.f32.xlu0 %v368
        %v370 = vpop.xlane.xlu0 %369
        %v371 = vmul.f32 %v366, %v366
        %v372 = vmul.f32 %v367, %v367
        %v373 = vadd.f32 %v371, %v372
        %374 = vadd.xlane.f32.xlu0 %v373
        %v375 = vpop.xlane.xlu0 %374
        %v376 = vld [vmem:[%s301] sm:$0xff]
        %v377 = vld [vmem:[%s301 + $0x8] sm:$0xff]
        %v378 = vadd.f32 %v376, %v377
        %379 = vadd.xlane.f32.xlu0 %v378
        %v380 = vpop.xlane.xlu0 %379
        %v381 = vmul.f32 %v376, %v376
        %v382 = vmul.f32 %v377, %v377
        %v383 = vadd.f32 %v381, %v382
        %384 = vadd.xlane.f32.xlu0 %v383
        %v385 = vpop.xlane.xlu0 %384
        %v386 = vmul.f32 %v376, %v366
        %v387 = vmul.f32 %v377, %v367
        %v388 = vadd.f32 %v386, %v387
        %389 = vadd.xlane.f32.xlu0 %v388
        %v390 = vpop.xlane.xlu0 %389
        %v391 = vld [vmem:[%s310] sm:$0xff]
        %v392 = vld [vmem:[%s310 + $0x8] sm:$0xff]
        %v393 = vadd.f32 %v391, %v392
        %394 = vadd.xlane.f32.xlu0 %v393
        %v395 = vpop.xlane.xlu0 %394
        %v396 = vmul.f32 %v391, %v391
        %v397 = vmul.f32 %v392, %v392
        %v398 = vadd.f32 %v396, %v397
        %399 = vadd.xlane.f32.xlu0 %v398
        %v400 = vpop.xlane.xlu0 %399
        %v401 = vmul.f32 %v391, %v366
        %v402 = vmul.f32 %v392, %v367
        %v403 = vadd.f32 %v401, %v402
        %404 = vadd.xlane.f32.xlu0 %v403
        %v405 = vpop.xlane.xlu0 %404
        %v406 = vld [vmem:[%s319] sm:$0xff]
        %v407 = vld [vmem:[%s319 + $0x8] sm:$0xff]
        %v408 = vadd.f32 %v406, %v407
        %409 = vadd.xlane.f32.xlu0 %v408
        %v410 = vpop.xlane.xlu0 %409
        %v411 = vmul.f32 %v406, %v406
        %v412 = vmul.f32 %v407, %v407
        %v413 = vadd.f32 %v411, %v412
        %414 = vadd.xlane.f32.xlu0 %v413
        %v415 = vpop.xlane.xlu0 %414
        %v416 = vmul.f32 %v406, %v366
        %v417 = vmul.f32 %v407, %v367
        %v418 = vadd.f32 %v416, %v417
        %419 = vadd.xlane.f32.xlu0 %v418
        %v420 = vpop.xlane.xlu0 %419
        %v421 = vlaneseq
        %v422 = vand.u32 %v421, 127
        %vm423 = vcmp.eq.s32.totalorder %v422, 0
        %v424 = vsel %vm423, %v370, 0.0
        %v425 = vadd.f32 %v424, 0.0
        %vm426 = vcmp.eq.s32.totalorder %v422, 1
        %v427 = vsel %vm426, %v375, 0.0
        %v428 = vadd.f32 %v425, %v427
        %vm429 = vcmp.eq.s32.totalorder %v422, 2
        %v430 = vsel %vm429, %v380, 0.0
        %v431 = vadd.f32 %v428, %v430
        %vm432 = vcmp.eq.s32.totalorder %v422, 3
        %v433 = vsel %vm432, %v385, 0.0
        %v434 = vadd.f32 %v431, %v433
        %vm435 = vcmp.eq.s32.totalorder %v422, 4
        %v436 = vsel %vm435, %v390, 0.0
        %v437 = vadd.f32 %v434, %v436
        %vm438 = vcmp.eq.s32.totalorder %v422, 5
        %v439 = vsel %vm438, %v395, 0.0
        %v440 = vadd.f32 %v437, %v439
        %vm441 = vcmp.eq.s32.totalorder %v422, 6
        %v442 = vsel %vm441, %v400, 0.0
        %v443 = vadd.f32 %v440, %v442
        %vm444 = vcmp.eq.s32.totalorder %v422, 7
        %v445 = vsel %vm444, %v405, 0.0
        %v446 = vadd.f32 %v443, %v445
        %vm447 = vcmp.eq.s32.totalorder %v422, 8
        %v448 = vsel %vm447, %v410, 0.0
        %v449 = vadd.f32 %v446, %v448
        %vm450 = vcmp.eq.s32.totalorder %v422, 9
        %v451 = vsel %vm450, %v415, 0.0
        %v452 = vadd.f32 %v449, %v451
        %vm453 = vcmp.eq.s32.totalorder %v422, 10
        %v454 = vsel %vm453, %v420, 0.0
        %v455 = vadd.f32 %v452, %v454
        %p456 = scmp.eq.s32.totalorder %s30, 0
        // Predicated region
        $region53: #{tpu_custom_call.1} parent=35 // pred_check
          %p457 = pneg %p456
        $region54: #{tpu_custom_call.1} parent=35 // pred_check_branch
          %459 = sbr.rel (%p457) target = $region56
        $region55: #{tpu_custom_call.1} parent=35 // pred_region
          %vm460 = vcmask 130048
          %461 = vst.msk [vmem:[#allocation10] sm:$0xff] %vm460, 0.0
        $region56: #{tpu_custom_call.1} parent=35 // pred_fallthru
          _
        %v462 = vld [vmem:[#allocation10] sm:$0xff]
        %v463 = vadd.f32 %v462, %v455
        %vm464 = vcmask 130048
        %465 = vst.msk [vmem:[#allocation10] sm:$0xff] %vm464, %v463
        // Predicated region
        $region57: #{tpu_custom_call.1} parent=35 // pred_check
          %p466 = pneg %p175
        $region58: #{tpu_custom_call.1} parent=35 // pred_check_branch
          %468 = sbr.rel (%p466) target = $region60
        $region59: #{tpu_custom_call.1} parent=35 // pred_region
          %s470 = ssub.s32 128, 128
          %471 = vsyncadd [#allocation4], %s470
          %s472 = smul.addr %s29, 128
          %s473 = scalar_lea.hbm %s4, %s472
          %s475 = sshll.u32 [#allocation10], 4
          %s476 = int_to_ptr.vmem [resolvable:$true] %s475
          %478 = dma.vmem_to_hbm [thread:$0]  %s476, 128, %s473, [#allocation4]
        $region60: #{tpu_custom_call.1} parent=35 // pred_fallthru
          _
        // Predicated region
        $region61: #{tpu_custom_call.1} parent=35 // pred_check
          %p479 = pneg %p175
        $region62: #{tpu_custom_call.1} parent=35 // pred_check_branch
          %481 = sbr.rel (%p479) target = $region64
        $region63: #{tpu_custom_call.1} parent=35 // pred_region
          %482 = dma.done [#allocation4], 128
        $region64: #{tpu_custom_call.1} parent=35 // pred_fallthru
          _
      $region36: #{tpu_custom_call.1} parent=5 // pred_fallthru
        _
      %p483 = scmp.le.s32.totalorder 2, %s20
      // Predicated region
      $region65: #{tpu_custom_call.1} parent=5 // pred_check
        %p484 = pneg %p483
      $region66: #{tpu_custom_call.1} parent=5 // pred_check_branch
        %486 = sbr.rel (%p484) target = $region68
      $region67: #{tpu_custom_call.1} parent=5 // pred_region
        %s487 = ssub.s32 %s20, 2
      $region68: #{tpu_custom_call.1} parent=5 // pred_fallthru
        _
    $region6: #{tpu_custom_call.1} parent=1 // loop_footer
      %s24 = sadd.s32 1, %s20
    $region7: #{tpu_custom_call.1} parent=1 // loop_footer_branch
      %19 = sbr.rel target = $region3
    $region8: #{tpu_custom_call.1} parent=1 // loop_exit
      _
    %488 = vsyncpa [#allocation3], 1
    %s489 = scalar_lea.sflag [#allocation3], 1
    %490 = vsyncpa %s489, 1
    %491 = vsyncpa [#allocation6], 1
    %s492 = scalar_lea.sflag [#allocation6], 1
    %493 = vsyncpa %s492, 1
    %494 = vsyncpa [#allocation9], 1
    %s495 = scalar_lea.sflag [#allocation9], 1
    %496 = vsyncpa %s495, 1
    %497 = vsyncpa [#allocation4], 1
    %s498 = scalar_lea.sflag [#allocation4], 1
    %499 = vsyncpa %s498, 1

</llo_original>
